<compile_context>
chip_gen: v7x
topology: tpu7x:2x2x1
jax: 0.10.0
libtpu: 0.0.40
codegen_flags: <defaults>
</compile_context>

<pallas_src>
import functools

import jax
import jax.numpy as jnp
from jax.experimental import pallas as pl
from jax.experimental.pallas import tpu as pltpu

LANE = 128  # TPU lane width; feature dims are padded to multiples of this.


def _round_up(x, m):
    return ((x + m - 1) // m) * m


# ----------------------------------------------------------------------------
# Fused whole-MLP kernel (one pallas_call for all layers).
# ----------------------------------------------------------------------------
def _fused_mlp_kernel(x_ref, *refs, num_layers):
    w_refs = refs[:num_layers]
    b_refs = refs[num_layers:2 * num_layers]
    o_ref = refs[2 * num_layers]

    h = x_ref[...]
    for i in range(num_layers):
        acc = jnp.dot(h.astype(w_refs[i].dtype), w_refs[i][...],
                      preferred_element_type=jnp.float32)
        acc = acc + b_refs[i][...]            # (1, Np) bias row broadcasts
        if i < num_layers - 1:
            acc = jnp.maximum(acc, 0.0)       # ReLU on hidden layers only
        h = acc                               # stays f32, stays on-chip
    o_ref[...] = h.astype(o_ref.dtype)


def _fused_mlp_call(x_p, w_p, b_p, *, tm, out_dtype, vmem_limit_bytes):
    """x_p: (Mp, K0p) padded; w_p[i]: (Kip, Nip); b_p[i]: (1, Nip)."""
    num_layers = len(w_p)
    mp, k0p = x_p.shape
    n_last = w_p[-1].shape[1]
    grid = (mp // tm,)

    in_specs = [pl.BlockSpec((tm, k0p), lambda i: (i, 0))]
    for w in w_p:   # full (padded) weight resident; constant block index
        in_specs.append(pl.BlockSpec(w.shape, lambda i: (0, 0)))
    for b in b_p:   # (1, Np) bias row; constant block index -> DMA'd once
        in_specs.append(pl.BlockSpec(b.shape, lambda i: (0, 0)))

    kernel = functools.partial(_fused_mlp_kernel, num_layers=num_layers)
    return pl.pallas_call(
        kernel,
        out_shape=jax.ShapeDtypeStruct((mp, n_last), out_dtype),
        grid_spec=pltpu.PrefetchScalarGridSpec(
            num_scalar_prefetch=0,
            grid=grid,
            in_specs=in_specs,
            out_specs=pl.BlockSpec((tm, n_last), lambda i: (i, 0)),
        ),
        compiler_params=pltpu.CompilerParams(
            dimension_semantics=("parallel",),
            vmem_limit_bytes=vmem_limit_bytes),
    )(x_p, *w_p, *b_p)


# ----------------------------------------------------------------------------
# Fallback: per-layer K/N-tiled Linear (+bias, +optional ReLU) with an f32
# VMEM accumulator — used when the fused weight stack would not fit in VMEM.
# ----------------------------------------------------------------------------
def _linear_tiled_kernel(x_ref, w_ref, b_ref, o_ref, acc_ref, *, apply_relu):
    k = pl.program_id(2)

    @pl.when(k == 0)
    def _():
        acc_ref[...] = jnp.zeros_like(acc_ref)

    acc_ref[...] += jnp.dot(x_ref[...].astype(w_ref.dtype), w_ref[...],
                            preferred_element_type=jnp.float32)

    @pl.when(k == pl.num_programs(2) - 1)
    def _():
        r = acc_ref[...] + b_ref[...]
        if apply_relu:
            r = jnp.maximum(r, 0.0)
        o_ref[...] = r.astype(o_ref.dtype)


def _pick_tile(dim_p, candidates):
    for c in candidates:
        if dim_p % c == 0:
            return c
    return LANE


def _linear_tiled_call(x_p, w, b, *, apply_relu, tm, out_dtype):
    mp, kp = x_p.shape
    _, np_ = w.shape
    tn = _pick_tile(np_, (512, 256, 128))
    tk = _pick_tile(kp, (1024, 512, 256, 128))
    grid = (mp // tm, np_ // tn, kp // tk)   # reduction (K) axis last

    vmem_bytes = ((tm * tk) + (tk * tn) + (tm * tn) + tn) * 4 * 2  # dbl-buffered
    vmem_bytes += tm * tn * 4                                      # accumulator
    vmem_limit = int(min(48 * 1024 * 1024,
                         max(16 * 1024 * 1024, int(vmem_bytes * 1.5))))

    kernel = functools.partial(_linear_tiled_kernel, apply_relu=apply_relu)
    return pl.pallas_call(
        kernel,
        out_shape=jax.ShapeDtypeStruct((mp, np_), out_dtype),
        grid_spec=pltpu.PrefetchScalarGridSpec(
            num_scalar_prefetch=0,
            grid=grid,
            in_specs=[
                pl.BlockSpec((tm, tk), lambda i, j, k: (i, k)),
                pl.BlockSpec((tk, tn), lambda i, j, k: (k, j)),
                pl.BlockSpec((1, tn), lambda i, j, k: (0, j)),
            ],
            out_specs=pl.BlockSpec((tm, tn), lambda i, j, k: (i, j)),
            scratch_shapes=[pltpu.VMEM((tm, tn), jnp.float32)],
        ),
        compiler_params=pltpu.CompilerParams(
            dimension_semantics=("parallel", "parallel", "arbitrary"),
            vmem_limit_bytes=vmem_limit),
    )(x_p, w, b)


# ----------------------------------------------------------------------------
# Forward driver (jitted once per batch shape).
# ----------------------------------------------------------------------------
def _pick_tm(mp8, *, fused, w_bytes, k0p, n_lastp):
    """Biggest batch tile whose fused working set comfortably fits VMEM."""
    if not fused:
        return 256 if mp8 >= 256 else mp8
    budget = 48 * 1024 * 1024
    for tm in (512, 256, 128):
        if mp8 < tm:
            continue
        act_bytes = (tm * k0p + tm * n_lastp) * 4 * 2  # dbl-buffered in/out tile
        if w_bytes + act_bytes <= budget:
            return tm
    return 128 if mp8 >= 128 else mp8


def _mlp_forward(x, weights_p, biases_p, *, output_dim, fused, dtype, w_bytes):
    num_layers = len(weights_p)
    m, k0 = x.shape
    mp8 = _round_up(max(m, 8), 8)
    k0p = weights_p[0].shape[0]
    n_lastp = weights_p[-1].shape[1]
    tm = _pick_tm(mp8, fused=fused, w_bytes=w_bytes, k0p=k0p, n_lastp=n_lastp)
    mp = _round_up(mp8, tm)
    x_p = jnp.zeros((mp, k0p), dtype).at[:m, :k0].set(x.astype(dtype))

    if fused:
        act_bytes = (tm * k0p + tm * n_lastp) * 4 * 2
        vmem_limit = int(min(48 * 1024 * 1024,
                             max(32 * 1024 * 1024,
                                 int((w_bytes + act_bytes) * 1.25))))
        y_p = _fused_mlp_call(x_p, weights_p, biases_p, tm=tm,
                              out_dtype=jnp.float32,
                              vmem_limit_bytes=vmem_limit)
    else:
        h = x_p
        for i in range(num_layers):
            h = _linear_tiled_call(h, weights_p[i], biases_p[i],
                                   apply_relu=(i < num_layers - 1),
                                   tm=tm, out_dtype=jnp.float32)
        y_p = h
    return y_p[:m, :output_dim]


class MLPPallas:
    """Mirror of the PyTorch MLP; weights stored as (in, out) = torch_W.T."""

    # Fused-kernel weight budget (conservative; leaves room for activations
    # and double-buffered input/output tiles on every chip generation).
    _FUSED_VMEM_BUDGET = 24 * 1024 * 1024

    def __init__(self, num_layers, input_dim, hidden_dim, output_dim, key,
                 dtype=jnp.float32, force_tiled=False):
        if num_layers < 1:
            raise ValueError('number of layers should be positive!')
        self.num_layers = num_layers
        self.linear_or_not = (num_layers == 1)
        self.output_dim = output_dim
        self.dtype = dtype

        if num_layers == 1:
            dims = [(input_dim, output_dim)]
        else:
            dims = [(input_dim, hidden_dim)]
            dims += [(hidden_dim, hidden_dim)] * (num_layers - 2)
            dims += [(hidden_dim, output_dim)]
        # TODO(synk): BatchNorm1d params exist in the PyTorch __init__ but are
        # unused in forward(), so they are not created here.

        self.weights, self.biases = [], []        # exact, un-padded
        self.weights_p, self.biases_p = [], []    # zero-padded, lane-dense
        for (fan_in, fan_out) in dims:
            key, wk, bk = jax.random.split(key, 3)
            bound = 1.0 / jnp.sqrt(float(fan_in))
            w = jax.random.uniform(wk, (fan_in, fan_out), jnp.float32,
                                   minval=-bound, maxval=bound)
            bias = jax.random.uniform(bk, (fan_out,), jnp.float32,
                                      minval=-bound, maxval=bound)
            self.weights.append(w)
            self.biases.append(bias)

            kp = _round_up(fan_in, LANE)
            np_ = _round_up(fan_out, LANE)
            wp = jnp.zeros((kp, np_), dtype).at[:fan_in, :fan_out].set(
                w.astype(dtype))
            bp = jnp.zeros((1, np_), jnp.float32).at[0, :fan_out].set(bias)
            self.weights_p.append(wp)
            self.biases_p.append(bp)

        w_bytes = sum(int(w.size) * w.dtype.itemsize * 2 for w in self.weights_p)
        w_bytes += sum(int(b.size) * 4 * 2 for b in self.biases_p)
        self._w_bytes = w_bytes
        self._fused_ok = (not force_tiled) and (w_bytes <= self._FUSED_VMEM_BUDGET)

        self._forward = jax.jit(functools.partial(
            _mlp_forward, output_dim=output_dim, fused=self._fused_ok,
            dtype=dtype, w_bytes=w_bytes))

    def __call__(self, x):
        return self._forward(x, tuple(self.weights_p), tuple(self.biases_p))


def _reference(mlp, x):
    hp = jax.lax.Precision.HIGHEST
    h = x
    for i in range(mlp.num_layers - 1):
        h = jnp.maximum(jnp.dot(h, mlp.weights[i], precision=hp)
                        + mlp.biases[i], 0.0)
    return jnp.dot(h, mlp.weights[-1], precision=hp) + mlp.biases[-1]


if __name__ == "__main__":
    key = jax.random.PRNGKey(0)
    key, xkey, mk1, mk2, xkey2, mk3 = jax.random.split(key, 6)

    batch, input_dim, hidden_dim, output_dim = 8, 16, 32, 4
    x = jax.random.normal(xkey, (batch, input_dim), jnp.float32)

    # Multi-layer path (num_layers=3): fused single-kernel chain.
    mlp3 = MLPPallas(3, input_dim, hidden_dim, output_dim, mk1)
    y3 = jax.block_until_ready(mlp3(x))
    ref3 = _reference(mlp3, x)
    assert y3.shape == (batch, output_dim)
    assert jnp.allclose(y3, ref3, atol=1e-5, rtol=1e-5)

    # Single-layer path (num_layers=1): plain Linear, still one fused call.
    mlp1 = MLPPallas(1, input_dim, hidden_dim, output_dim, mk2)
    y1 = jax.block_until_ready(mlp1(x))
    ref1 = _reference(mlp1, x)
    assert y1.shape == (batch, output_dim)
    assert jnp.allclose(y1, ref1, atol=1e-5, rtol=1e-5)

    # Exercise the K/N-tiled fallback path (forced) at a slightly larger shape.
    b2, in2, hid2, out2 = 96, 200, 256, 10
    x2 = jax.random.normal(xkey2, (b2, in2), jnp.float32)
    mlp_big = MLPPallas(2, in2, hid2, out2, mk3, force_tiled=True)
    y2 = jax.block_until_ready(mlp_big(x2))
    ref2 = _reference(mlp_big, x2)
    assert y2.shape == (b2, out2)
    assert jnp.allclose(y2, ref2, atol=1e-4, rtol=1e-4)

    print("KERNEL_OK")
</pallas_src>

<mosaic_0001>
module attributes {stable_mosaic.version = 11 : i64} {
  func.func @_fused_mlp_kernel(%arg0: i32, %arg1: memref<8x128xf32, #tpu.memory_space<vmem>>, %arg2: memref<128x128xf32, #tpu.memory_space<vmem>>, %arg3: memref<128x128xf32, #tpu.memory_space<vmem>>, %arg4: memref<128x128xf32, #tpu.memory_space<vmem>>, %arg5: memref<1x128xf32, #tpu.memory_space<vmem>>, %arg6: memref<1x128xf32, #tpu.memory_space<vmem>>, %arg7: memref<1x128xf32, #tpu.memory_space<vmem>>, %arg8: memref<8x128xf32, #tpu.memory_space<vmem>>) attributes {dimension_semantics = [#tpu.dimension_semantics<parallel>], iteration_bounds = array<i64: 1>, scalar_prefetch = 0 : i64, scratch_operands = 0 : i64, tpu.core_type = #tpu.core_type<tc>, window_params = [{transform_indices = @transform_0, window_bounds = array<i64: 8, 128>}, {pipeline_mode = #tpu.pipeline_mode<synchronous>, transform_indices = @transform_1, window_bounds = array<i64: 128, 128>}, {pipeline_mode = #tpu.pipeline_mode<synchronous>, transform_indices = @transform_2, window_bounds = array<i64: 128, 128>}, {pipeline_mode = #tpu.pipeline_mode<synchronous>, transform_indices = @transform_3, window_bounds = array<i64: 128, 128>}, {pipeline_mode = #tpu.pipeline_mode<synchronous>, transform_indices = @transform_4, window_bounds = array<i64: 1, 128>}, {pipeline_mode = #tpu.pipeline_mode<synchronous>, transform_indices = @transform_5, window_bounds = array<i64: 1, 128>}, {pipeline_mode = #tpu.pipeline_mode<synchronous>, transform_indices = @transform_6, window_bounds = array<i64: 1, 128>}, {transform_indices = @transform_7, window_bounds = array<i64: 8, 128>}]} {
    %c0 = arith.constant 0 : index
    %c0_0 = arith.constant 0 : index
    %0 = vector.load %arg1[%c0, %c0_0] : memref<8x128xf32, #tpu.memory_space<vmem>>, vector<8x128xf32>
    %c0_1 = arith.constant 0 : index
    %c0_2 = arith.constant 0 : index
    %1 = vector.load %arg2[%c0_1, %c0_2] : memref<128x128xf32, #tpu.memory_space<vmem>>, vector<128x128xf32>
    %cst = arith.constant dense<0.000000e+00> : vector<8x128xf32>
    %2 = tpu.matmul %0, %1, %cst {dimension_numbers = #tpu.dot_dimension_numbers<[1], [0], [0], [1], [0, 0, 1, 1], [], []>} : vector<8x128xf32>, vector<128x128xf32>, vector<8x128xf32> -> vector<8x128xf32>
    %c0_3 = arith.constant 0 : index
    %c0_4 = arith.constant 0 : index
    %3 = vector.load %arg5[%c0_3, %c0_4] : memref<1x128xf32, #tpu.memory_space<vmem>>, vector<1x128xf32>
    %4 = vector.broadcast %3 : vector<1x128xf32> to vector<8x128xf32>
    %5 = arith.addf %2, %4 : vector<8x128xf32>
    %cst_5 = arith.constant 0.000000e+00 : f32
    %6 = vector.broadcast %cst_5 : f32 to vector<8x128xf32>
    %7 = arith.maximumf %5, %6 : vector<8x128xf32>
    %c0_6 = arith.constant 0 : index
    %c0_7 = arith.constant 0 : index
    %8 = vector.load %arg3[%c0_6, %c0_7] : memref<128x128xf32, #tpu.memory_space<vmem>>, vector<128x128xf32>
    %cst_8 = arith.constant dense<0.000000e+00> : vector<8x128xf32>
    %9 = tpu.matmul %7, %8, %cst_8 {dimension_numbers = #tpu.dot_dimension_numbers<[1], [0], [0], [1], [0, 0, 1, 1], [], []>} : vector<8x128xf32>, vector<128x128xf32>, vector<8x128xf32> -> vector<8x128xf32>
    %c0_9 = arith.constant 0 : index
    %c0_10 = arith.constant 0 : index
    %10 = vector.load %arg6[%c0_9, %c0_10] : memref<1x128xf32, #tpu.memory_space<vmem>>, vector<1x128xf32>
    %11 = vector.broadcast %10 : vector<1x128xf32> to vector<8x128xf32>
    %12 = arith.addf %9, %11 : vector<8x128xf32>
    %cst_11 = arith.constant 0.000000e+00 : f32
    %13 = vector.broadcast %cst_11 : f32 to vector<8x128xf32>
    %14 = arith.maximumf %12, %13 : vector<8x128xf32>
    %c0_12 = arith.constant 0 : index
    %c0_13 = arith.constant 0 : index
    %15 = vector.load %arg4[%c0_12, %c0_13] : memref<128x128xf32, #tpu.memory_space<vmem>>, vector<128x128xf32>
    %cst_14 = arith.constant dense<0.000000e+00> : vector<8x128xf32>
    %16 = tpu.matmul %14, %15, %cst_14 {dimension_numbers = #tpu.dot_dimension_numbers<[1], [0], [0], [1], [0, 0, 1, 1], [], []>} : vector<8x128xf32>, vector<128x128xf32>, vector<8x128xf32> -> vector<8x128xf32>
    %c0_15 = arith.constant 0 : index
    %c0_16 = arith.constant 0 : index
    %17 = vector.load %arg7[%c0_15, %c0_16] : memref<1x128xf32, #tpu.memory_space<vmem>>, vector<1x128xf32>
    %18 = vector.broadcast %17 : vector<1x128xf32> to vector<8x128xf32>
    %19 = arith.addf %16, %18 : vector<8x128xf32>
    %c0_17 = arith.constant 0 : index
    %c0_18 = arith.constant 0 : index
    %20 = vector.load %arg8[%c0_17, %c0_18] : memref<8x128xf32, #tpu.memory_space<vmem>>, vector<8x128xf32>
    tpu.vector_store %arg8[%c0_17, %c0_18], %19 {strides = array<i32>} : memref<8x128xf32, #tpu.memory_space<vmem>>, vector<8x128xf32>,
    return
  }
  func.func @transform_0(%arg0: i32) -> (i32, i32) {
    %c0_i32 = arith.constant 0 : i32
    %c0_i32_0 = arith.constant 0 : i32
    return %arg0, %c0_i32 : i32, i32
  }
  func.func @transform_1(%arg0: i32) -> (i32, i32) {
    %c0_i32 = arith.constant 0 : i32
    %c0_i32_0 = arith.constant 0 : i32
    %c0_i32_1 = arith.constant 0 : i32
    return %c0_i32, %c0_i32_0 : i32, i32
  }
  func.func @transform_2(%arg0: i32) -> (i32, i32) {
    %c0_i32 = arith.constant 0 : i32
    %c0_i32_0 = arith.constant 0 : i32
    %c0_i32_1 = arith.constant 0 : i32
    return %c0_i32, %c0_i32_0 : i32, i32
  }
  func.func @transform_3(%arg0: i32) -> (i32, i32) {
    %c0_i32 = arith.constant 0 : i32
    %c0_i32_0 = arith.constant 0 : i32
    %c0_i32_1 = arith.constant 0 : i32
    return %c0_i32, %c0_i32_0 : i32, i32
  }
  func.func @transform_4(%arg0: i32) -> (i32, i32) {
    %c0_i32 = arith.constant 0 : i32
    %c0_i32_0 = arith.constant 0 : i32
    %c0_i32_1 = arith.constant 0 : i32
    return %c0_i32, %c0_i32_0 : i32, i32
  }
  func.func @transform_5(%arg0: i32) -> (i32, i32) {
    %c0_i32 = arith.constant 0 : i32
    %c0_i32_0 = arith.constant 0 : i32
    %c0_i32_1 = arith.constant 0 : i32
    return %c0_i32, %c0_i32_0 : i32, i32
  }
  func.func @transform_6(%arg0: i32) -> (i32, i32) {
    %c0_i32 = arith.constant 0 : i32
    %c0_i32_0 = arith.constant 0 : i32
    %c0_i32_1 = arith.constant 0 : i32
    return %c0_i32, %c0_i32_0 : i32, i32
  }
  func.func @transform_7(%arg0: i32) -> (i32, i32) {
    %c0_i32 = arith.constant 0 : i32
    %c0_i32_0 = arith.constant 0 : i32
    return %arg0, %c0_i32 : i32, i32
  }
}

</mosaic_0001>

<llo_original>
// kernel: _mlp_forward.1
$region0: #{_mlp_forward.1}
  #allocation0 [shape = 'u32[]', space=smem, size = 0x4, offset = 0x4, fixed_abs, tag = 'smem constant byte address 0x4 - core index']
  #allocation1 [shape = 'u32[144,128]{1,0:T(1,128)}', space=vmem, size = 0x12000, scoped, tag = 'internal scratch']
  %s0 = inlined_call_operand.vmem [shape: f32[8,128], index: 0, kind: input, shape index: {}]
  %s1 = inlined_call_operand.hbm [shape: f32[128,128], index: 1, kind: input, shape index: {}]
  %s2 = inlined_call_operand.hbm [shape: f32[128,128], index: 2, kind: input, shape index: {}]
  %s3 = inlined_call_operand.hbm [shape: f32[128,128], index: 3, kind: input, shape index: {}]
  %s4 = inlined_call_operand.vmem [shape: f32[1,128], index: 4, kind: input, shape index: {}]
  %s5 = inlined_call_operand.vmem [shape: f32[1,128], index: 5, kind: input, shape index: {}]
  %s6 = inlined_call_operand.vmem [shape: f32[1,128], index: 6, kind: input, shape index: {}]
  %s7 = inlined_call_operand.vmem [shape: f32[8,128], index: 7, kind: output, shape index: {}]
  %s8 = sld [smem:[#allocation0]]
  $region50: #{_mlp_forward.1} parent=0
    _
  %s10 = ssub.s32 1, %s8
  %s11 = scalar_select 0, %s10, %s8
  $region1: #{_mlp_forward.1} parent=0
    #allocation2 [shape = 'u8[65536]{0}', space=vmem, size = 0x10000, scoped, tag = 'input window, operand 1, single buffered']
    #allocation3 [shape = 's32[1]{0}', space=sflag, size = 0x4, scoped, tag = 'scoped memory for _mlp_forward.1']
    #allocation4 [shape = 'u8[65536]{0}', space=vmem, size = 0x10000, scoped, tag = 'input window, operand 2, single buffered']
    #allocation5 [shape = 's32[1]{0}', space=sflag, size = 0x4, scoped, tag = 'scoped memory for _mlp_forward.1']
    #allocation6 [shape = 'u8[65536]{0}', space=vmem, size = 0x10000, scoped, tag = 'input window, operand 3, single buffered']
    %12 = vsyncpa [#allocation3], 0
    %13 = vsyncpa [#allocation5], 0
    // Predicated region
    $region2: #{_mlp_forward.1} parent=1 // pred_check
      _
    $region3: #{_mlp_forward.1} parent=1 // pred_check_branch
      %15 = sbr.rel (0) target = $region5
    $region4: #{_mlp_forward.1} parent=1 // pred_region
      _
    $region5: #{_mlp_forward.1} parent=1 // pred_fallthru
      _
    // Predicated region
    $region6: #{_mlp_forward.1} parent=1 // pred_check
      _
    $region7: #{_mlp_forward.1} parent=1 // pred_check_branch
      %17 = sbr.rel (0) target = $region9
    $region8: #{_mlp_forward.1} parent=1 // pred_region
      %s19 = ssub.s32 2048, 2048
      %20 = vsyncadd [#allocation3], %s19
      %s21 = sshll.u32 [#allocation2], 4
      %s22 = int_to_ptr.vmem [resolvable:$true] %s21
      %27 = dma.hbm_to_vmem [thread:$0]  %s1, 2048, %s22, [#allocation3], 128, 128, 8
    $region9: #{_mlp_forward.1} parent=1 // pred_fallthru
      _
    // Predicated region
    $region10: #{_mlp_forward.1} parent=1 // pred_check
      _
    $region11: #{_mlp_forward.1} parent=1 // pred_check_branch
      %29 = sbr.rel (0) target = $region13
    $region12: #{_mlp_forward.1} parent=1 // pred_region
      %s31 = ssub.s32 2048, 2048
      %32 = vsyncadd [#allocation5], %s31
      %s33 = sshll.u32 [#allocation4], 4
      %s34 = int_to_ptr.vmem [resolvable:$true] %s33
      %39 = dma.hbm_to_vmem [thread:$0]  %s2, 2048, %s34, [#allocation5], 128, 128, 8
    $region13: #{_mlp_forward.1} parent=1 // pred_fallthru
      _
    // Predicated region
    $region14: #{_mlp_forward.1} parent=1 // pred_check
      _
    $region15: #{_mlp_forward.1} parent=1 // pred_check_branch
      %41 = sbr.rel (0) target = $region17
    $region16: #{_mlp_forward.1} parent=1 // pred_region
      %s43 = ssub.s32 2048, 2048
      %44 = vsyncadd [#allocation5], %s43
      %s45 = sshll.u32 [#allocation6], 4
      %s46 = int_to_ptr.vmem [resolvable:$true] %s45
      %51 = dma.hbm_to_vmem [thread:$0]  %s3, 2048, %s46, [#allocation5], 128, 128, 8
    $region17: #{_mlp_forward.1} parent=1 // pred_fallthru
      _
    // Predicated region
    $region18: #{_mlp_forward.1} parent=1 // pred_check
      _
    $region19: #{_mlp_forward.1} parent=1 // pred_check_branch
      %53 = sbr.rel (0) target = $region21
    $region20: #{_mlp_forward.1} parent=1 // pred_region
      _
    $region21: #{_mlp_forward.1} parent=1 // pred_fallthru
      _
    // Predicated region
    $region22: #{_mlp_forward.1} parent=1 // pred_check
      _
    $region23: #{_mlp_forward.1} parent=1 // pred_check_branch
      %55 = sbr.rel (0) target = $region25
    $region24: #{_mlp_forward.1} parent=1 // pred_region
      _
    $region25: #{_mlp_forward.1} parent=1 // pred_fallthru
      _
    // Predicated region
    $region26: #{_mlp_forward.1} parent=1 // pred_check
      _
    $region27: #{_mlp_forward.1} parent=1 // pred_check_branch
      %57 = sbr.rel (0) target = $region29
    $region28: #{_mlp_forward.1} parent=1 // pred_region
      _
    $region29: #{_mlp_forward.1} parent=1 // pred_fallthru
      _
    // Predicated region
    $region30: #{_mlp_forward.1} parent=1 // pred_check
      _
    $region31: #{_mlp_forward.1} parent=1 // pred_check_branch
      %59 = sbr.rel (0) target = $region33
    $region32: #{_mlp_forward.1} parent=1 // pred_region
      %60 = dma.done [#allocation3], 2048
    $region33: #{_mlp_forward.1} parent=1 // pred_fallthru
      _
    // Predicated region
    $region34: #{_mlp_forward.1} parent=1 // pred_check
      _
    $region35: #{_mlp_forward.1} parent=1 // pred_check_branch
      %62 = sbr.rel (0) target = $region37
    $region36: #{_mlp_forward.1} parent=1 // pred_region
      %63 = dma.done [#allocation5], 2048
    $region37: #{_mlp_forward.1} parent=1 // pred_fallthru
      _
    // Predicated region
    $region38: #{_mlp_forward.1} parent=1 // pred_check
      _
    $region39: #{_mlp_forward.1} parent=1 // pred_check_branch
      %65 = sbr.rel (0) target = $region41
    $region40: #{_mlp_forward.1} parent=1 // pred_region
      %66 = dma.done [#allocation5], 2048
    $region41: #{_mlp_forward.1} parent=1 // pred_fallthru
      _
    %v67 = vld [vmem:[%s0] sm:$0xff]
    %v68 = vld [vmem:[#allocation2] sm:$0xff]
    %v69 = vld [vmem:[#allocation2 + $0x8] sm:$0xff]
    %v70 = vld [vmem:[#allocation2 + $0x10] sm:$0xff]
    %v71 = vld [vmem:[#allocation2 + $0x18] sm:$0xff]
    %v72 = vld [vmem:[#allocation2 + $0x20] sm:$0xff]
    %v73 = vld [vmem:[#allocation2 + $0x28] sm:$0xff]
    %v74 = vld [vmem:[#allocation2 + $0x30] sm:$0xff]
    %v75 = vld [vmem:[#allocation2 + $0x38] sm:$0xff]
    %v76 = vld [vmem:[#allocation2 + $0x40] sm:$0xff]
    %v77 = vld [vmem:[#allocation2 + $0x48] sm:$0xff]
    %v78 = vld [vmem:[#allocation2 + $0x50] sm:$0xff]
    %v79 = vld [vmem:[#allocation2 + $0x58] sm:$0xff]
    %v80 = vld [vmem:[#allocation2 + $0x60] sm:$0xff]
    %v81 = vld [vmem:[#allocation2 + $0x68] sm:$0xff]
    %v82 = vld [vmem:[#allocation2 + $0x70] sm:$0xff]
    %v83 = vld [vmem:[#allocation2 + $0x78] sm:$0xff]
    %v84 = vld [vmem:[%s4] sm:$0x1]
    %v86 = vlaneseq
    %v87 = vshrl.u32 %v86, 7
    %v88 = vsub.s32 0, %v87
    %v89 = vrot.slane %v84, %v88
    %91 = vmatprep.subr.mxu0 0.0
    %92 = vmatpush1.msra.mxu0 %v68
    %93 = vmatprep.subr.mxu0 0.0
    %94 = vmatpush1.msra.mxu0 %v69
    %95 = vmatprep.subr.mxu0 0.0
    %96 = vmatpush1.msra.mxu0 %v70
    %97 = vmatprep.subr.mxu0 0.0
    %98 = vmatpush1.msra.mxu0 %v71
    %99 = vmatprep.subr.mxu0 0.0
    %100 = vmatpush1.msra.mxu0 %v72
    %101 = vmatprep.subr.mxu0 0.0
    %102 = vmatpush1.msra.mxu0 %v73
    %103 = vmatprep.subr.mxu0 0.0
    %104 = vmatpush1.msra.mxu0 %v74
    %105 = vmatprep.subr.mxu0 0.0
    %106 = vmatpush1.msra.mxu0 %v75
    %107 = vmatprep.subr.mxu0 0.0
    %108 = vmatpush1.msra.mxu0 %v76
    %109 = vmatprep.subr.mxu0 0.0
    %110 = vmatpush1.msra.mxu0 %v77
    %111 = vmatprep.subr.mxu0 0.0
    %112 = vmatpush1.msra.mxu0 %v78
    %113 = vmatprep.subr.mxu0 0.0
    %114 = vmatpush1.msra.mxu0 %v79
    %115 = vmatprep.subr.mxu0 0.0
    %116 = vmatpush1.msra.mxu0 %v80
    %117 = vmatprep.subr.mxu0 0.0
    %118 = vmatpush1.msra.mxu0 %v81
    %119 = vmatprep.subr.mxu0 0.0
    %120 = vmatpush1.msra.mxu0 %v82
    %121 = vmatprep.subr.mxu0 0.0
    %122 = vmatpush1.msra.mxu0 %v83
    %123 = vmatprep.subr.mxu0 0.0
    %124 = vmatpush1.msra.mxu0 0.0
    %125 = vmatprep.subr.mxu0 0.0
    %126 = vmatpush1.msra.mxu0 0.0
    %127 = vmatprep.subr.mxu0 0.0
    %128 = vmatpush1.msra.mxu0 0.0
    %129 = vmatprep.subr.mxu0 0.0
    %130 = vmatpush1.msra.mxu0 0.0
    %131 = vmatprep.subr.mxu0 0.0
    %132 = vmatpush1.msra.mxu0 0.0
    %133 = vmatprep.subr.mxu0 0.0
    %134 = vmatpush1.msra.mxu0 0.0
    %135 = vmatprep.subr.mxu0 0.0
    %136 = vmatpush1.msra.mxu0 0.0
    %137 = vmatprep.subr.mxu0 0.0
    %138 = vmatpush1.msra.mxu0 0.0
    %139 = vmatprep.subr.mxu0 0.0
    %140 = vmatpush1.msra.mxu0 0.0
    %141 = vmatprep.subr.mxu0 0.0
    %142 = vmatpush1.msra.mxu0 0.0
    %143 = vmatprep.subr.mxu0 0.0
    %144 = vmatpush1.msra.mxu0 0.0
    %145 = vmatprep.subr.mxu0 0.0
    %146 = vmatpush1.msra.mxu0 0.0
    %147 = vmatprep.subr.mxu0 0.0
    %148 = vmatpush1.msra.mxu0 0.0
    %149 = vmatprep.subr.mxu0 0.0
    %150 = vmatpush1.msra.mxu0 0.0
    %151 = vmatprep.subr.mxu0 0.0
    %152 = vmatpush1.msra.mxu0 0.0
    %153 = vmatprep.subr.mxu0 0.0
    %154 = vmatpush1.msra.mxu0 0.0
    %155 = vmatprep.mubr.f32.mxu0 0.0
    %156 = vmatmul.mubr.f32.gmra.mrb[0].mxu0 %v67
    %v157 = vpop.f32.mrb[0].mxu0
    %v158 = vadd.f32 %v89, %v157
    %v159 = vpop.f32.mrb[0].mxu0
    %160 = vdwg.mxu0
    %v161 = vmax.f32 %v158, 0.0
    %v162 = vld [vmem:[#allocation4] sm:$0xff]
    %v163 = vld [vmem:[#allocation4 + $0x8] sm:$0xff]
    %v164 = vld [vmem:[#allocation4 + $0x10] sm:$0xff]
    %v165 = vld [vmem:[#allocation4 + $0x18] sm:$0xff]
    %v166 = vld [vmem:[#allocation4 + $0x20] sm:$0xff]
    %v167 = vld [vmem:[#allocation4 + $0x28] sm:$0xff]
    %v168 = vld [vmem:[#allocation4 + $0x30] sm:$0xff]
    %v169 = vld [vmem:[#allocation4 + $0x38] sm:$0xff]
    %v170 = vld [vmem:[#allocation4 + $0x40] sm:$0xff]
    %v171 = vld [vmem:[#allocation4 + $0x48] sm:$0xff]
    %v172 = vld [vmem:[#allocation4 + $0x50] sm:$0xff]
    %v173 = vld [vmem:[#allocation4 + $0x58] sm:$0xff]
    %v174 = vld [vmem:[#allocation4 + $0x60] sm:$0xff]
    %v175 = vld [vmem:[#allocation4 + $0x68] sm:$0xff]
    %v176 = vld [vmem:[#allocation4 + $0x70] sm:$0xff]
    %v177 = vld [vmem:[#allocation4 + $0x78] sm:$0xff]
    %v178 = vld [vmem:[%s5] sm:$0x1]
    %v180 = vlaneseq
    %v181 = vshrl.u32 %v180, 7
    %v182 = vsub.s32 0, %v181
    %v183 = vrot.slane %v178, %v182
    %185 = vmatprep.subr.mxu0 0.0
    %186 = vmatpush1.msra.mxu0 %v162
    %187 = vmatprep.subr.mxu0 0.0
    %188 = vmatpush1.msra.mxu0 %v163
    %189 = vmatprep.subr.mxu0 0.0
    %190 = vmatpush1.msra.mxu0 %v164
    %191 = vmatprep.subr.mxu0 0.0
    %192 = vmatpush1.msra.mxu0 %v165
    %193 = vmatprep.subr.mxu0 0.0
    %194 = vmatpush1.msra.mxu0 %v166
    %195 = vmatprep.subr.mxu0 0.0
    %196 = vmatpush1.msra.mxu0 %v167
    %197 = vmatprep.subr.mxu0 0.0
    %198 = vmatpush1.msra.mxu0 %v168
    %199 = vmatprep.subr.mxu0 0.0
    %200 = vmatpush1.msra.mxu0 %v169
    %201 = vmatprep.subr.mxu0 0.0
    %202 = vmatpush1.msra.mxu0 %v170
    %203 = vmatprep.subr.mxu0 0.0
    %204 = vmatpush1.msra.mxu0 %v171
    %205 = vmatprep.subr.mxu0 0.0
    %206 = vmatpush1.msra.mxu0 %v172
    %207 = vmatprep.subr.mxu0 0.0
    %208 = vmatpush1.msra.mxu0 %v173
    %209 = vmatprep.subr.mxu0 0.0
    %210 = vmatpush1.msra.mxu0 %v174
    %211 = vmatprep.subr.mxu0 0.0
    %212 = vmatpush1.msra.mxu0 %v175
    %213 = vmatprep.subr.mxu0 0.0
    %214 = vmatpush1.msra.mxu0 %v176
    %215 = vmatprep.subr.mxu0 0.0
    %216 = vmatpush1.msra.mxu0 %v177
    %217 = vmatprep.subr.mxu0 0.0
    %218 = vmatpush1.msra.mxu0 0.0
    %219 = vmatprep.subr.mxu0 0.0
    %220 = vmatpush1.msra.mxu0 0.0
    %221 = vmatprep.subr.mxu0 0.0
    %222 = vmatpush1.msra.mxu0 0.0
    %223 = vmatprep.subr.mxu0 0.0
    %224 = vmatpush1.msra.mxu0 0.0
    %225 = vmatprep.subr.mxu0 0.0
    %226 = vmatpush1.msra.mxu0 0.0
    %227 = vmatprep.subr.mxu0 0.0
    %228 = vmatpush1.msra.mxu0 0.0
    %229 = vmatprep.subr.mxu0 0.0
    %230 = vmatpush1.msra.mxu0 0.0
    %231 = vmatprep.subr.mxu0 0.0
    %232 = vmatpush1.msra.mxu0 0.0
    %233 = vmatprep.subr.mxu0 0.0
    %234 = vmatpush1.msra.mxu0 0.0
    %235 = vmatprep.subr.mxu0 0.0
    %236 = vmatpush1.msra.mxu0 0.0
    %237 = vmatprep.subr.mxu0 0.0
    %238 = vmatpush1.msra.mxu0 0.0
    %239 = vmatprep.subr.mxu0 0.0
    %240 = vmatpush1.msra.mxu0 0.0
    %241 = vmatprep.subr.mxu0 0.0
    %242 = vmatpush1.msra.mxu0 0.0
    %243 = vmatprep.subr.mxu0 0.0
    %244 = vmatpush1.msra.mxu0 0.0
    %245 = vmatprep.subr.mxu0 0.0
    %246 = vmatpush1.msra.mxu0 0.0
    %247 = vmatprep.subr.mxu0 0.0
    %248 = vmatpush1.msra.mxu0 0.0
    %249 = vmatprep.mubr.f32.mxu0 0.0
    %250 = vmatmul.mubr.f32.gmra.mrb[0].mxu0 %v161
    %v251 = vpop.f32.mrb[0].mxu0
    %v252 = vadd.f32 %v183, %v251
    %v253 = vpop.f32.mrb[0].mxu0
    %254 = vdwg.mxu0
    %v255 = vmax.f32 %v252, 0.0
    %v256 = vld [vmem:[#allocation6] sm:$0xff]
    %v257 = vld [vmem:[#allocation6 + $0x8] sm:$0xff]
    %v258 = vld [vmem:[#allocation6 + $0x10] sm:$0xff]
    %v259 = vld [vmem:[#allocation6 + $0x18] sm:$0xff]
    %v260 = vld [vmem:[#allocation6 + $0x20] sm:$0xff]
    %v261 = vld [vmem:[#allocation6 + $0x28] sm:$0xff]
    %v262 = vld [vmem:[#allocation6 + $0x30] sm:$0xff]
    %v263 = vld [vmem:[#allocation6 + $0x38] sm:$0xff]
    %v264 = vld [vmem:[#allocation6 + $0x40] sm:$0xff]
    %v265 = vld [vmem:[#allocation6 + $0x48] sm:$0xff]
    %v266 = vld [vmem:[#allocation6 + $0x50] sm:$0xff]
    %v267 = vld [vmem:[#allocation6 + $0x58] sm:$0xff]
    %v268 = vld [vmem:[#allocation6 + $0x60] sm:$0xff]
    %v269 = vld [vmem:[#allocation6 + $0x68] sm:$0xff]
    %v270 = vld [vmem:[#allocation6 + $0x70] sm:$0xff]
    %v271 = vld [vmem:[#allocation6 + $0x78] sm:$0xff]
    %v272 = vld [vmem:[%s6] sm:$0x1]
    %v274 = vlaneseq
    %v275 = vshrl.u32 %v274, 7
    %v276 = vsub.s32 0, %v275
    %v277 = vrot.slane %v272, %v276
    %279 = vmatprep.subr.mxu0 0.0
    %280 = vmatpush1.msra.mxu0 %v256
    %281 = vmatprep.subr.mxu0 0.0
    %282 = vmatpush1.msra.mxu0 %v257
    %283 = vmatprep.subr.mxu0 0.0
    %284 = vmatpush1.msra.mxu0 %v258
    %285 = vmatprep.subr.mxu0 0.0
    %286 = vmatpush1.msra.mxu0 %v259
    %287 = vmatprep.subr.mxu0 0.0
    %288 = vmatpush1.msra.mxu0 %v260
    %289 = vmatprep.subr.mxu0 0.0
    %290 = vmatpush1.msra.mxu0 %v261
    %291 = vmatprep.subr.mxu0 0.0
    %292 = vmatpush1.msra.mxu0 %v262
    %293 = vmatprep.subr.mxu0 0.0
    %294 = vmatpush1.msra.mxu0 %v263
    %295 = vmatprep.subr.mxu0 0.0
    %296 = vmatpush1.msra.mxu0 %v264
    %297 = vmatprep.subr.mxu0 0.0
    %298 = vmatpush1.msra.mxu0 %v265
    %299 = vmatprep.subr.mxu0 0.0
    %300 = vmatpush1.msra.mxu0 %v266
    %301 = vmatprep.subr.mxu0 0.0
    %302 = vmatpush1.msra.mxu0 %v267
    %303 = vmatprep.subr.mxu0 0.0
    %304 = vmatpush1.msra.mxu0 %v268
    %305 = vmatprep.subr.mxu0 0.0
    %306 = vmatpush1.msra.mxu0 %v269
    %307 = vmatprep.subr.mxu0 0.0
    %308 = vmatpush1.msra.mxu0 %v270
    %309 = vmatprep.subr.mxu0 0.0
    %310 = vmatpush1.msra.mxu0 %v271
    %311 = vmatprep.subr.mxu0 0.0
    %312 = vmatpush1.msra.mxu0 0.0
    %313 = vmatprep.subr.mxu0 0.0
    %314 = vmatpush1.msra.mxu0 0.0
    %315 = vmatprep.subr.mxu0 0.0
    %316 = vmatpush1.msra.mxu0 0.0
    %317 = vmatprep.subr.mxu0 0.0
    %318 = vmatpush1.msra.mxu0 0.0
    %319 = vmatprep.subr.mxu0 0.0
    %320 = vmatpush1.msra.mxu0 0.0
    %321 = vmatprep.subr.mxu0 0.0
    %322 = vmatpush1.msra.mxu0 0.0
    %323 = vmatprep.subr.mxu0 0.0
    %324 = vmatpush1.msra.mxu0 0.0
    %325 = vmatprep.subr.mxu0 0.0
    %326 = vmatpush1.msra.mxu0 0.0
    %327 = vmatprep.subr.mxu0 0.0
    %328 = vmatpush1.msra.mxu0 0.0
    %329 = vmatprep.subr.mxu0 0.0
    %330 = vmatpush1.msra.mxu0 0.0
    %331 = vmatprep.subr.mxu0 0.0
    %332 = vmatpush1.msra.mxu0 0.0
    %333 = vmatprep.subr.mxu0 0.0
    %334 = vmatpush1.msra.mxu0 0.0
    %335 = vmatprep.subr.mxu0 0.0
    %336 = vmatpush1.msra.mxu0 0.0
    %337 = vmatprep.subr.mxu0 0.0
    %338 = vmatpush1.msra.mxu0 0.0
    %339 = vmatprep.subr.mxu0 0.0
    %340 = vmatpush1.msra.mxu0 0.0
    %341 = vmatprep.subr.mxu0 0.0
    %342 = vmatpush1.msra.mxu0 0.0
    %343 = vmatprep.mubr.f32.mxu0 0.0
    %344 = vmatmul.mubr.f32.gmra.mrb[0].mxu0 %v255
    %v345 = vpop.f32.mrb[0].mxu0
    %v346 = vadd.f32 %v277, %v345
    %v347 = vpop.f32.mrb[0].mxu0
    %348 = vdwg.mxu0
    %349 = vst [vmem:[%s7] sm:$0xff] %v346
    // Predicated region
    $region42: #{_mlp_forward.1} parent=1 // pred_check
      _
    $region43: #{_mlp_forward.1} parent=1 // pred_check_branch
      %351 = sbr.rel (0) target = $region45
    $region44: #{_mlp_forward.1} parent=1 // pred_region
      _
    $region45: #{_mlp_forward.1} parent=1 // pred_fallthru
      _
    // Predicated region
    $region46: #{_mlp_forward.1} parent=1 // pred_check
      _
    $region47: #{_mlp_forward.1} parent=1 // pred_check_branch
      %353 = sbr.rel (0) target = $region49
    $region48: #{_mlp_forward.1} parent=1 // pred_region
      _
    $region49: #{_mlp_forward.1} parent=1 // pred_fallthru
      _
    %354 = vsyncpa [#allocation3], 1
    %355 = vsyncpa [#allocation5], 1

</llo_original>
